<compile_context>
chip_gen: v6e
topology: v6e:2x2x1
jax: 0.10.0
libtpu: 0.0.40
codegen_flags: <defaults>
</compile_context>

<pallas_src>
import functools

import jax
import jax.numpy as jnp
from jax.experimental import pallas as pl
from jax.experimental.pallas import tpu as pltpu

LANES = 128
NUM_SPLITS = 2          # leading "parallel" grid axis (dual TensorCores on v7x)
TILE_ROWS_MAX = 1024    # (1024, 128) f32 block = 512 KiB per input


def _bce_sum_kernel(pred_ref, true_ref, out_ref, acc_ref, *, inv_tau):
    i = pl.program_id(1)

    @pl.when(i == 0)
    def _():
        acc_ref[...] = jnp.zeros_like(acc_ref)

    x = pred_ref[...].astype(jnp.float32) * inv_tau
    y = true_ref[...].astype(jnp.float32)

    # Numerically stable BCE-with-logits (matches PyTorch):
    #   max(x, 0) - x*y + log(1 + exp(-|x|))
    per_elem = jnp.maximum(x, 0.0) - x * y + jnp.log1p(jnp.exp(-jnp.abs(x)))

    # Fold the (tile_rows, 128) tile down to one (8, 128) vreg of partial sums
    # and accumulate on the VPU; the scalar reduction happens once, outside.
    r, l = per_elem.shape
    acc_ref[...] += per_elem.reshape(r // 8, 8, l).sum(axis=0)

    @pl.when(i == pl.num_programs(1) - 1)
    def _():
        out_ref[0] = acc_ref[...]


def soft_bce_with_logits_loss(pred, true, tau=1.0):
    """Pallas TPU implementation of SoftBinaryCrossEntropyLoss.forward."""
    assert pred.shape == true.shape
    n_valid = pred.size
    assert n_valid > 0

    # Sublane granularity: 8 rows for 32-bit inputs, 16 for bf16, 32 for 8-bit.
    itemsize = min(jnp.dtype(pred.dtype).itemsize, jnp.dtype(true.dtype).itemsize)
    sublane_mult = max(8, 32 // max(int(itemsize), 1))

    rows_needed = pl.cdiv(n_valid, LANES)
    rows_per_split = pl.cdiv(rows_needed, NUM_SPLITS)
    tile_rows = min(TILE_ROWS_MAX,
                    pl.cdiv(rows_per_split, sublane_mult) * sublane_mult)
    tiles_per_split = pl.cdiv(rows_per_split, tile_rows)
    total_rows = NUM_SPLITS * tiles_per_split * tile_rows
    padded_elems = total_rows * LANES
    pad = padded_elems - n_valid

    # Keep native dtypes through the DMA; the f32 upcast happens in-kernel.
    flat_pred = jnp.ravel(pred)
    flat_true = jnp.ravel(true)
    if pad > 0:   # static; skip the extra HBM round-trip when shapes tile.
        # Padded elements: x = -100 after /tau, y = 0  ->  per-element loss
        # log1p(exp(-100)) ~= 3.8e-44 ~= 0, so no correction term is needed.
        pad_val = -100.0 * abs(float(tau))
        flat_pred = jnp.pad(flat_pred, (0, pad), constant_values=pad_val)
        flat_true = jnp.pad(flat_true, (0, pad))
    pred2d = flat_pred.reshape(total_rows, LANES)
    true2d = flat_true.reshape(total_rows, LANES)

    tile_spec = pl.BlockSpec((tile_rows, LANES),
                             lambda c, i: (c * tiles_per_split + i, 0))
    kernel = functools.partial(_bce_sum_kernel, inv_tau=1.0 / float(tau))

    bytes_accessed = (padded_elems * (pred2d.dtype.itemsize + true2d.dtype.itemsize)
                      + NUM_SPLITS * 8 * LANES * 4)

    partials = pl.pallas_call(
        kernel,
        out_shape=jax.ShapeDtypeStruct((NUM_SPLITS, 8, LANES), jnp.float32),
        grid_spec=pltpu.PrefetchScalarGridSpec(
            num_scalar_prefetch=0,
            grid=(NUM_SPLITS, tiles_per_split),
            in_specs=[tile_spec, tile_spec],
            out_specs=pl.BlockSpec((1, 8, LANES), lambda c, i: (c, 0, 0)),
            scratch_shapes=[pltpu.VMEM((8, LANES), jnp.float32)],
        ),
        compiler_params=pltpu.CompilerParams(
            dimension_semantics=("parallel", "arbitrary"),
        ),
        cost_estimate=pl.CostEstimate(
            flops=6 * padded_elems,
            transcendentals=2 * padded_elems,
            bytes_accessed=int(bytes_accessed),
        ),
    )(pred2d, true2d)

    # Single cheap final reduction over the tiny lane-dense partial-sum slab.
    loss_sum = jnp.sum(partials)
    return (loss_sum / jnp.float32(n_valid)).astype(jnp.float32)


def _reference(pred, true, tau=1.0):
    x = pred.astype(jnp.float32) / tau
    y = true.astype(jnp.float32)
    per = jnp.maximum(x, 0.0) - x * y + jnp.log1p(jnp.exp(-jnp.abs(x)))
    return jnp.mean(per)


if __name__ == "__main__":
    key = jax.random.PRNGKey(0)
    k1, k2, k3, k4 = jax.random.split(key, 4)

    # NCHW-style shape consistent with a segmentation-style loss input.
    shape = (2, 4, 16, 16)
    pred = jax.random.normal(k1, shape, dtype=jnp.float32) * 2.0
    true = jax.random.uniform(k2, shape, dtype=jnp.float32)   # soft targets in [0, 1)

    for tau in (1.0, 2.0):
        loss = jax.block_until_ready(soft_bce_with_logits_loss(pred, true, tau=tau))
        ref = jax.block_until_ready(_reference(pred, true, tau=tau))
        assert jnp.allclose(loss, ref, rtol=1e-5, atol=1e-5), (tau, loss, ref)

    # Ragged shape: exercises the tail-padding path (pad contributes ~0).
    shape2 = (3, 5, 7)
    pred2 = jax.random.normal(k3, shape2, dtype=jnp.float32)
    true2 = jax.random.uniform(k4, shape2, dtype=jnp.float32)
    loss2 = jax.block_until_ready(soft_bce_with_logits_loss(pred2, true2, tau=1.0))
    ref2 = jax.block_until_ready(_reference(pred2, true2, tau=1.0))
    assert jnp.allclose(loss2, ref2, rtol=1e-5, atol=1e-5), (loss2, ref2)

    # bf16 inputs ride through the DMA un-upcast (half the HBM read bytes).
    pred3 = pred.astype(jnp.bfloat16)
    true3 = true.astype(jnp.bfloat16)
    loss3 = jax.block_until_ready(soft_bce_with_logits_loss(pred3, true3, tau=1.0))
    ref3 = jax.block_until_ready(_reference(pred3, true3, tau=1.0))
    assert jnp.allclose(loss3, ref3, rtol=1e-4, atol=1e-4), (loss3, ref3)

    print("KERNEL_OK")
</pallas_src>

<mosaic_0001>
module attributes {stable_mosaic.version = 11 : i64} {
  func.func @_bce_sum_kernel(%arg0: i32, %arg1: i32, %arg2: memref<8x128xf32, #tpu.memory_space<vmem>>, %arg3: memref<8x128xf32, #tpu.memory_space<vmem>>, %arg4: memref<1x8x128xf32, #tpu.memory_space<vmem>>, %arg5: memref<8x128xf32, #tpu.memory_space<vmem>>) attributes {dimension_semantics = [#tpu.dimension_semantics<parallel>, #tpu.dimension_semantics<arbitrary>], iteration_bounds = array<i64: 2, 1>, scalar_prefetch = 0 : i64, scratch_operands = 1 : i64, tpu.core_type = #tpu.core_type<tc>, window_params = [{transform_indices = @transform_0, window_bounds = array<i64: 8, 128>}, {transform_indices = @transform_1, window_bounds = array<i64: 8, 128>}, {transform_indices = @transform_2, window_bounds = array<i64: 1, 8, 128>}]} {
    %c0_i32 = arith.constant 0 : i32
    %0 = arith.cmpi eq, %arg1, %c0_i32 : i32
    %1 = arith.extui %0 : i1 to i32
    %c0_i32_0 = arith.constant 0 : i32
    %2 = arith.cmpi ne, %1, %c0_i32_0 : i32
    scf.if %2 {
      %cst_13 = arith.constant 0.000000e+00 : f32
      %25 = vector.broadcast %cst_13 : f32 to vector<8x128xf32>
      %c0_14 = arith.constant 0 : index
      %c0_15 = arith.constant 0 : index
      %26 = vector.load %arg5[%c0_14, %c0_15] : memref<8x128xf32, #tpu.memory_space<vmem>>, vector<8x128xf32>
      tpu.vector_store %arg5[%c0_14, %c0_15], %25 {strides = array<i32>} : memref<8x128xf32, #tpu.memory_space<vmem>>, vector<8x128xf32>,
    } else {
    }
    %c0 = arith.constant 0 : index
    %c0_1 = arith.constant 0 : index
    %3 = vector.load %arg2[%c0, %c0_1] : memref<8x128xf32, #tpu.memory_space<vmem>>, vector<8x128xf32>
    %cst = arith.constant 1.000000e+00 : f32
    %4 = vector.broadcast %cst : f32 to vector<8x128xf32>
    %5 = arith.mulf %3, %4 : vector<8x128xf32>
    %c0_2 = arith.constant 0 : index
    %c0_3 = arith.constant 0 : index
    %6 = vector.load %arg3[%c0_2, %c0_3] : memref<8x128xf32, #tpu.memory_space<vmem>>, vector<8x128xf32>
    %cst_4 = arith.constant 0.000000e+00 : f32
    %7 = vector.broadcast %cst_4 : f32 to vector<8x128xf32>
    %8 = arith.maximumf %5, %7 : vector<8x128xf32>
    %9 = arith.mulf %5, %6 : vector<8x128xf32>
    %10 = arith.subf %8, %9 : vector<8x128xf32>
    %11 = math.absf %5 : vector<8x128xf32>
    %cst_5 = arith.constant 0.000000e+00 : f32
    %12 = vector.broadcast %cst_5 : f32 to vector<8x128xf32>
    %13 = arith.subf %12, %11 : vector<8x128xf32>
    %14 = math.exp %13 : vector<8x128xf32>
    %15 = math.log1p %14 : vector<8x128xf32>
    %16 = arith.addf %10, %15 : vector<8x128xf32>
    %c0_6 = arith.constant 0 : index
    %c0_7 = arith.constant 0 : index
    %17 = vector.load %arg5[%c0_6, %c0_7] : memref<8x128xf32, #tpu.memory_space<vmem>>, vector<8x128xf32>
    %18 = vector.shape_cast %16 : vector<8x128xf32> to vector<1x8x128xf32>
    %cst_8 = arith.constant dense<0.000000e+00> : vector<8x128xf32>
    %19 = vector.multi_reduction <add>, %18, %cst_8 [0] : vector<1x8x128xf32> to vector<8x128xf32>
    %20 = arith.addf %17, %19 : vector<8x128xf32>
    %c0_9 = arith.constant 0 : index
    %c0_10 = arith.constant 0 : index
    %21 = vector.load %arg5[%c0_9, %c0_10] : memref<8x128xf32, #tpu.memory_space<vmem>>, vector<8x128xf32>
    tpu.vector_store %arg5[%c0_9, %c0_10], %20 {strides = array<i32>} : memref<8x128xf32, #tpu.memory_space<vmem>>, vector<8x128xf32>,
    %c0_i32_11 = arith.constant 0 : i32
    %22 = arith.cmpi eq, %arg1, %c0_i32_11 : i32
    %23 = arith.extui %22 : i1 to i32
    %c0_i32_12 = arith.constant 0 : i32
    %24 = arith.cmpi ne, %23, %c0_i32_12 : i32
    scf.if %24 {
      %c0_13 = arith.constant 0 : index
      %c0_14 = arith.constant 0 : index
      %25 = vector.load %arg5[%c0_13, %c0_14] : memref<8x128xf32, #tpu.memory_space<vmem>>, vector<8x128xf32>
      %c0_15 = arith.constant 0 : index
      %c0_16 = arith.constant 0 : index
      %c0_17 = arith.constant 0 : index
      %26 = vector.load %arg4[%c0_15, %c0_16, %c0_17] : memref<1x8x128xf32, #tpu.memory_space<vmem>>, vector<1x8x128xf32>
      %27 = vector.shape_cast %26 : vector<1x8x128xf32> to vector<8x128xf32>
      %28 = vector.shape_cast %25 : vector<8x128xf32> to vector<1x8x128xf32>
      tpu.vector_store %arg4[%c0_15, %c0_16, %c0_17], %28 {strides = array<i32>} : memref<1x8x128xf32, #tpu.memory_space<vmem>>, vector<1x8x128xf32>,
    } else {
    }
    return
  }
  func.func @transform_0(%arg0: i32, %arg1: i32) -> (i32, i32) {
    %c1_i32 = arith.constant 1 : i32
    %0 = arith.muli %arg0, %c1_i32 : i32
    %1 = arith.addi %0, %arg1 : i32
    %c0_i32 = arith.constant 0 : i32
    %c0_i32_0 = arith.constant 0 : i32
    return %1, %c0_i32 : i32, i32
  }
  func.func @transform_1(%arg0: i32, %arg1: i32) -> (i32, i32) {
    %c1_i32 = arith.constant 1 : i32
    %0 = arith.muli %arg0, %c1_i32 : i32
    %1 = arith.addi %0, %arg1 : i32
    %c0_i32 = arith.constant 0 : i32
    %c0_i32_0 = arith.constant 0 : i32
    return %1, %c0_i32 : i32, i32
  }
  func.func @transform_2(%arg0: i32, %arg1: i32) -> (i32, i32, i32) {
    %c0_i32 = arith.constant 0 : i32
    %c0_i32_0 = arith.constant 0 : i32
    %c0_i32_1 = arith.constant 0 : i32
    return %arg0, %c0_i32, %c0_i32_0 : i32, i32, i32
  }
}

</mosaic_0001>

<llo_original>
// kernel: tpu_custom_call.1
$region0: #{tpu_custom_call.1}
  #allocation0 [shape = 'u32[]', space=smem, size = 0x4, offset = 0x4, fixed_abs, tag = 'smem constant byte address 0x4 - core index']
  #allocation1 [shape = 'u32[144,128]{1,0:T(1,128)}', space=vmem, size = 0x12000, scoped, tag = 'internal scratch']
  #allocation2 [shape = 'f32[8,128]{1,0:T(8,128)}', space=vmem, size = 0x1000, scoped, tag = 'scratch operand']
  %s0 = inlined_call_operand.hbm [shape: f32[16,128], index: 0, kind: input, shape index: {}]
  %s1 = inlined_call_operand.hbm [shape: f32[16,128], index: 1, kind: input, shape index: {}]
  %s2 = inlined_call_operand.hbm [shape: f32[2,8,128], index: 2, kind: output, shape index: {}]
  %s3 = sld [smem:[#allocation0]]
  $region57: #{tpu_custom_call.1} parent=0
    _
  %s5 = ssub.s32 1, %s3
  %s6 = scalar_select 0, %s5, %s3
  $region1: #{tpu_custom_call.1} parent=0
    #allocation3 [shape = 'u8[8192]{0}', space=vmem, size = 0x2000, scoped, tag = 'input window, operand 0']
    #allocation4 [shape = 's32[2]{0}', space=sflag, size = 0x8, scoped, tag = 'scoped memory for tpu_custom_call.1']
    #allocation5 [shape = 's32[2]{0}', space=sflag, size = 0x8, scoped, tag = 'scoped memory for tpu_custom_call.1']
    #allocation6 [shape = 'u8[8192]{0}', space=vmem, size = 0x2000, scoped, tag = 'input window, operand 1']
    #allocation7 [shape = 's32[2]{0}', space=sflag, size = 0x8, scoped, tag = 'scoped memory for tpu_custom_call.1']
    #allocation8 [shape = 'u8[8192]{0}', space=vmem, size = 0x2000, scoped, tag = 'output window, operand 0']
    %7 = vsyncpa [#allocation4], 0
    %s8 = scalar_lea.sflag [#allocation4], 1
    %9 = vsyncpa %s8, 0
    %10 = vsyncpa [#allocation7], 0
    %s11 = scalar_lea.sflag [#allocation7], 1
    %12 = vsyncpa %s11, 0
    %13 = vsyncpa [#allocation5], 0
    %s14 = scalar_lea.sflag [#allocation5], 1
    %15 = vsyncpa %s14, 0
    loop: start=0, step=1, limit=4
    $region2: #{tpu_custom_call.1} parent=1 // loop_pre_header
      _
    $region3: #{tpu_custom_call.1} parent=1 // loop_header
      %s17 = sphi 0, %s21
      %p18 = scmp.ge.s32.totalorder %s17, 4
      %s24 = sphi 0, %s36
      %s25 = sphi 0, %s32
      %s26 = sphi 0, %s24
      %s27 = sphi 0, %s25
      %s28 = sphi 0, %s26
      %s29 = sphi 0, %s27
      %s41 = sphi 0, %s43
      %s44 = sphi 0, %s41
      %s45 = sphi 0, %s44
      %s61 = sphi 0, %s45
      %s69 = sphi 0, %s71
      %s72 = sphi 0, %s69
      %s73 = sphi 0, %s72
      %s89 = sphi 0, %s73
      %s95 = sphi 0, %s97
      %s98 = sphi 0, %s95
      %s99 = sphi 0, %s98
      %s115 = sphi 0, %s99
    $region4: #{tpu_custom_call.1} parent=1 // loop_header_branch
      %20 = sbr.rel (%p18) target = $region8
    $region5: #{tpu_custom_call.1} parent=1 // loop_body
      %s22 = ssub.s32 %s17, 1
      %s23 = ssub.s32 %s17, 2
      %s30 = sadd.s32 1, %s25
      %p31 = scmp.ge.s32.totalorder %s30, 1
      %s32 = scalar_select %p31, 0, %s30
      %s33 = sadd.s32 1, %s24
      %s34 = scalar_select %p31, %s33, %s24
      %p35 = scmp.ge.s32.totalorder %s34, 2
      %s36 = scalar_select %p35, 0, %s34
      %s37 = sadd.s32 %s24, %s25
      %s38 = sadd.s32 %s36, %s32
      %s39 = ssub.s32 %s37, %s38
      %p40 = scmp.eq.s32.totalorder %s39, 0
      %s42 = sadd.s32 %s41, 1
      %s43 = scalar_select %p40, %s41, %s42
      %p46 = pneg %p40
      %p47 = scmp.eq.s32.totalorder %s17, 1
      %p48 = por %p46, %p47
      %p49 = scmp.ne.s32.totalorder %s41, %s44
      %p50 = scmp.eq.s32.totalorder %s17, 0
      %p51 = por %p49, %p50
      %p52 = scmp.ne.s32.totalorder %s41, %s44
      %p53 = scmp.eq.s32.totalorder %s22, 1
      %p54 = por %p52, %p53
      %p55 = scmp.ne.s32.totalorder %s44, %s45
      %p56 = scmp.eq.s32.totalorder %s22, 0
      %p57 = por %p55, %p56
      %p58 = scmp.ne.s32.totalorder %s44, %s45
      %p59 = scmp.eq.s32.totalorder %s23, 1
      %p60 = por %p58, %p59
      %p62 = scmp.ne.s32.totalorder %s45, %s61
      %p63 = scmp.eq.s32.totalorder %s23, 0
      %p64 = por %p62, %p63
      %s65 = sadd.s32 %s24, %s25
      %s66 = sadd.s32 %s36, %s32
      %s67 = ssub.s32 %s65, %s66
      %p68 = scmp.eq.s32.totalorder %s67, 0
      %s70 = sadd.s32 %s69, 1
      %s71 = scalar_select %p68, %s69, %s70
      %p74 = pneg %p68
      %p75 = scmp.eq.s32.totalorder %s17, 1
      %p76 = por %p74, %p75
      %p77 = scmp.ne.s32.totalorder %s69, %s72
      %p78 = scmp.eq.s32.totalorder %s17, 0
      %p79 = por %p77, %p78
      %p80 = scmp.ne.s32.totalorder %s69, %s72
      %p81 = scmp.eq.s32.totalorder %s22, 1
      %p82 = por %p80, %p81
      %p83 = scmp.ne.s32.totalorder %s72, %s73
      %p84 = scmp.eq.s32.totalorder %s22, 0
      %p85 = por %p83, %p84
      %p86 = scmp.ne.s32.totalorder %s72, %s73
      %p87 = scmp.eq.s32.totalorder %s23, 1
      %p88 = por %p86, %p87
      %p90 = scmp.ne.s32.totalorder %s73, %s89
      %p91 = scmp.eq.s32.totalorder %s23, 0
      %p92 = por %p90, %p91
      %s93 = ssub.s32 %s24, %s36
      %p94 = scmp.eq.s32.totalorder %s93, 0
      %s96 = sadd.s32 %s95, 1
      %s97 = scalar_select %p94, %s95, %s96
      %p100 = pneg %p94
      %p101 = scmp.eq.s32.totalorder %s17, 1
      %p102 = por %p100, %p101
      %p103 = scmp.ne.s32.totalorder %s95, %s98
      %p104 = scmp.eq.s32.totalorder %s17, 0
      %p105 = por %p103, %p104
      %p106 = scmp.ne.s32.totalorder %s95, %s98
      %p107 = scmp.eq.s32.totalorder %s22, 1
      %p108 = por %p106, %p107
      %p109 = scmp.ne.s32.totalorder %s98, %s99
      %p110 = scmp.eq.s32.totalorder %s22, 0
      %p111 = por %p109, %p110
      %p112 = scmp.ne.s32.totalorder %s98, %s99
      %p113 = scmp.eq.s32.totalorder %s23, 1
      %p114 = por %p112, %p113
      %p116 = scmp.ne.s32.totalorder %s99, %s115
      %p117 = scmp.eq.s32.totalorder %s23, 0
      %p118 = por %p116, %p117
      %p119 = scmp.le.s32.totalorder 1, %s17
      %p120 = scmp.lt.s32.totalorder %s17, 3
      %p121 = pnand %p119, %p120
      %p122 = pneg %p121
      // Predicated region
      $region9: #{tpu_custom_call.1} parent=5 // pred_check
        _
      $region10: #{tpu_custom_call.1} parent=5 // pred_check_branch
        %124 = sbr.rel (%p121) target = $region12
      $region11: #{tpu_custom_call.1} parent=5 // pred_region
        %s125 = ssub.s32 %s17, 1
      $region12: #{tpu_custom_call.1} parent=5 // pred_fallthru
        _
      %p126 = scmp.lt.s32.totalorder %s17, 2
      // Predicated region
      $region13: #{tpu_custom_call.1} parent=5 // pred_check
        %p127 = pneg %p126
      $region14: #{tpu_custom_call.1} parent=5 // pred_check_branch
        %129 = sbr.rel (%p127) target = $region16
      $region15: #{tpu_custom_call.1} parent=5 // pred_region
        // Predicated region
        $region17: #{tpu_custom_call.1} parent=15 // pred_check
          %p130 = pneg %p51
        $region18: #{tpu_custom_call.1} parent=15 // pred_check_branch
          %132 = sbr.rel (%p130) target = $region20
        $region19: #{tpu_custom_call.1} parent=15 // pred_region
          %s133 = sand.u32 %s41, 1
          %s134 = scalar_lea.sflag [#allocation4], %s133
          %s135 = sand.u32 %s41, 1
          %s136 = smul.addr %s135, 8
          %s137 = scalar_lea.vmem [#allocation3], %s136
          %s138 = sadd.s32 %s24, %s25
          %s140 = ssub.s32 128, 128
          %141 = vsyncadd %s134, %s140
          %s142 = smul.addr %s138, 128
          %s143 = scalar_lea.hbm %s0, %s142
          %s145 = sshll.u32 %s137, 4
          %s146 = int_to_ptr.vmem [resolvable:$true] %s145
          %148 = dma.hbm_to_vmem [thread:$0]  %s143, 128, %s146, %s134
        $region20: #{tpu_custom_call.1} parent=15 // pred_fallthru
          _
        // Predicated region
        $region21: #{tpu_custom_call.1} parent=15 // pred_check
          %p149 = pneg %p79
        $region22: #{tpu_custom_call.1} parent=15 // pred_check_branch
          %151 = sbr.rel (%p149) target = $region24
        $region23: #{tpu_custom_call.1} parent=15 // pred_region
          %s152 = sand.u32 %s69, 1
          %s153 = scalar_lea.sflag [#allocation7], %s152
          %s154 = sand.u32 %s69, 1
          %s155 = smul.addr %s154, 8
          %s156 = scalar_lea.vmem [#allocation6], %s155
          %s157 = sadd.s32 %s24, %s25
          %s159 = ssub.s32 128, 128
          %160 = vsyncadd %s153, %s159
          %s161 = smul.addr %s157, 128
          %s162 = scalar_lea.hbm %s1, %s161
          %s164 = sshll.u32 %s156, 4
          %s165 = int_to_ptr.vmem [resolvable:$true] %s164
          %167 = dma.hbm_to_vmem [thread:$0]  %s162, 128, %s165, %s153
        $region24: #{tpu_custom_call.1} parent=15 // pred_fallthru
          _
      $region16: #{tpu_custom_call.1} parent=5 // pred_fallthru
        _
      %p168 = scmp.le.s32.totalorder 1, %s17
      %p169 = scmp.lt.s32.totalorder %s17, 3
      %p170 = pnand %p168, %p169
      %p171 = pneg %p170
      // Predicated region
      $region25: #{tpu_custom_call.1} parent=5 // pred_check
        _
      $region26: #{tpu_custom_call.1} parent=5 // pred_check_branch
        %173 = sbr.rel (%p170) target = $region28
      $region27: #{tpu_custom_call.1} parent=5 // pred_region
        %s174 = ssub.s32 %s17, 1
        %s175 = sand.u32 %s44, 1
        %s176 = scalar_lea.sflag [#allocation4], %s175
        %s177 = sand.u32 %s44, 1
        %s178 = smul.addr %s177, 8
        %s179 = scalar_lea.vmem [#allocation3], %s178
        // Predicated region
        $region29: #{tpu_custom_call.1} parent=27 // pred_check
          %p180 = pneg %p57
        $region30: #{tpu_custom_call.1} parent=27 // pred_check_branch
          %182 = sbr.rel (%p180) target = $region32
        $region31: #{tpu_custom_call.1} parent=27 // pred_region
          %183 = dma.done %s176, 128
        $region32: #{tpu_custom_call.1} parent=27 // pred_fallthru
          _
        %s184 = sand.u32 %s72, 1
        %s185 = scalar_lea.sflag [#allocation7], %s184
        %s186 = sand.u32 %s72, 1
        %s187 = smul.addr %s186, 8
        %s188 = scalar_lea.vmem [#allocation6], %s187
        // Predicated region
        $region33: #{tpu_custom_call.1} parent=27 // pred_check
          %p189 = pneg %p85
        $region34: #{tpu_custom_call.1} parent=27 // pred_check_branch
          %191 = sbr.rel (%p189) target = $region36
        $region35: #{tpu_custom_call.1} parent=27 // pred_region
          %192 = dma.done %s185, 128
        $region36: #{tpu_custom_call.1} parent=27 // pred_fallthru
          _
        %s193 = sand.u32 %s44, 1
        %s194 = scalar_lea.sflag [#allocation4], %s193
        %s195 = sand.u32 %s44, 1
        %s196 = smul.addr %s195, 8
        %s197 = scalar_lea.vmem [#allocation3], %s196
        %p198 = pneg %p57
        %p199 = pneg %p54
        %s200 = sand.u32 %s72, 1
        %s201 = scalar_lea.sflag [#allocation7], %s200
        %s202 = sand.u32 %s72, 1
        %s203 = smul.addr %s202, 8
        %s204 = scalar_lea.vmem [#allocation6], %s203
        %p205 = pneg %p85
        %p206 = pneg %p82
        %p207 = pneg %p111
        %p208 = pneg %p108
        %s209 = sand.u32 %s98, 1
        %s210 = scalar_lea.sflag [#allocation5], %s209
        %s211 = sand.u32 %s98, 1
        %s212 = smul.addr %s211, 8
        %s213 = scalar_lea.vmem [#allocation8], %s212
        %s214 = sadd.s32 %s26, %s27
        %s215 = sadd.s32 %s26, %s27
        %p216 = scmp.eq.s32.totalorder %s27, 0
        // Predicated region
        $region37: #{tpu_custom_call.1} parent=27 // pred_check
          %p217 = pneg %p216
        $region38: #{tpu_custom_call.1} parent=27 // pred_check_branch
          %219 = sbr.rel (%p217) target = $region40
        $region39: #{tpu_custom_call.1} parent=27 // pred_region
          %220 = vst [vmem:[#allocation2] sm:$0xff] 0.0
        $region40: #{tpu_custom_call.1} parent=27 // pred_fallthru
          _
        %v221 = vld [vmem:[%s179] sm:$0xff]
        %v222 = vld [vmem:[%s188] sm:$0xff]
        %v223 = vmax.f32 %v221, 0.0
        %v224 = vmul.f32 %v221, %v222
        %v225 = vsub.f32 %v223, %v224
        %v226 = vand.u32 2147483647, %v221
        %v227 = vsub.f32 0.0, %v226
        %v228 = vmul.f32 %v227, 1.442695
        %v229 = vpow.pop %v228
        %v230 = vadd.f32 %v229, 1.0
        %v231 = vlog2.pop %v230
        %v232 = vmul.f32 %v231, 0.6931472
        %v233 = vmul.f32 -0.5, %v229
        %v234 = vadd.f32 %v233, 1.0
        %v235 = vmul.f32 %v234, %v229
        %v236 = vand.u32 2147483647, %v229
        %vm237 = vcmp.lt.f32.partialorder %v236, 0.0004427343
        %v238 = vsel %vm237, %v235, %v232
        %v239 = vadd.f32 %v225, %v238
        %v240 = vld [vmem:[#allocation2] sm:$0xff]
        %v241 = vadd.f32 %v239, 0.0
        %v242 = vadd.f32 %v240, %v241
        %243 = vst [vmem:[#allocation2] sm:$0xff] %v242
        // Predicated region
        $region41: #{tpu_custom_call.1} parent=27 // pred_check
          %p244 = pneg %p216
        $region42: #{tpu_custom_call.1} parent=27 // pred_check_branch
          %246 = sbr.rel (%p244) target = $region44
        $region43: #{tpu_custom_call.1} parent=27 // pred_region
          %v247 = vld [vmem:[#allocation2] sm:$0xff]
          %248 = vst [vmem:[%s213] sm:$0xff] %v247
        $region44: #{tpu_custom_call.1} parent=27 // pred_fallthru
          _
        %s249 = sand.u32 %s98, 1
        %s250 = scalar_lea.sflag [#allocation5], %s249
        %s251 = sand.u32 %s98, 1
        %s252 = smul.addr %s251, 8
        %s253 = scalar_lea.vmem [#allocation8], %s252
        // Predicated region
        $region45: #{tpu_custom_call.1} parent=27 // pred_check
          %p254 = pneg %p108
        $region46: #{tpu_custom_call.1} parent=27 // pred_check_branch
          %256 = sbr.rel (%p254) target = $region48
        $region47: #{tpu_custom_call.1} parent=27 // pred_region
          %s258 = ssub.s32 128, 128
          %259 = vsyncadd %s250, %s258
          %s260 = smul.addr %s26, 128
          %s261 = scalar_lea.hbm %s2, %s260
          %s263 = sshll.u32 %s253, 4
          %s264 = int_to_ptr.vmem [resolvable:$true] %s263
          %266 = dma.vmem_to_hbm [thread:$0]  %s264, 128, %s261, %s250
        $region48: #{tpu_custom_call.1} parent=27 // pred_fallthru
          _
      $region28: #{tpu_custom_call.1} parent=5 // pred_fallthru
        _
      %p267 = scmp.le.s32.totalorder 2, %s17
      // Predicated region
      $region49: #{tpu_custom_call.1} parent=5 // pred_check
        %p268 = pneg %p267
      $region50: #{tpu_custom_call.1} parent=5 // pred_check_branch
        %270 = sbr.rel (%p268) target = $region52
      $region51: #{tpu_custom_call.1} parent=5 // pred_region
        %s271 = ssub.s32 %s17, 2
        // Predicated region
        $region53: #{tpu_custom_call.1} parent=51 // pred_check
          %p272 = pneg %p114
        $region54: #{tpu_custom_call.1} parent=51 // pred_check_branch
          %274 = sbr.rel (%p272) target = $region56
        $region55: #{tpu_custom_call.1} parent=51 // pred_region
          %s275 = sand.u32 %s99, 1
          %s276 = scalar_lea.sflag [#allocation5], %s275
          %s277 = sand.u32 %s99, 1
          %s278 = smul.addr %s277, 8
          %s279 = scalar_lea.vmem [#allocation8], %s278
          %280 = dma.done %s276, 128
        $region56: #{tpu_custom_call.1} parent=51 // pred_fallthru
          _
      $region52: #{tpu_custom_call.1} parent=5 // pred_fallthru
        _
    $region6: #{tpu_custom_call.1} parent=1 // loop_footer
      %s21 = sadd.s32 1, %s17
    $region7: #{tpu_custom_call.1} parent=1 // loop_footer_branch
      %16 = sbr.rel target = $region3
    $region8: #{tpu_custom_call.1} parent=1 // loop_exit
      _
    %281 = vsyncpa [#allocation4], 1
    %s282 = scalar_lea.sflag [#allocation4], 1
    %283 = vsyncpa %s282, 1
    %284 = vsyncpa [#allocation7], 1
    %s285 = scalar_lea.sflag [#allocation7], 1
    %286 = vsyncpa %s285, 1
    %287 = vsyncpa [#allocation5], 1
    %s288 = scalar_lea.sflag [#allocation5], 1
    %289 = vsyncpa %s288, 1

</llo_original>
